<compile_context>
chip_gen: v5e
topology: v5e:2x2
jax: 0.10.0
libtpu: 0.0.40
codegen_flags: <defaults>
</compile_context>

<pallas_src>
import functools
import math

import jax
import jax.numpy as jnp
from jax.experimental import pallas as pl
from jax.experimental.pallas import tpu as pltpu


def _cdiv(a, b):
    return -(-a // b)


def _round_up(a, b):
    return _cdiv(a, b) * b


def _simnorm_kernel_mxu(x_ref, s_ref, st_ref, o_ref, *, simnorm_dim):
    """Lane-dense SimNorm block: per-group sums via MXU selector matmuls."""
    x = x_ref[...].astype(jnp.float32)                 # (tm, L) lane-dense slab
    tm, L = x.shape
    d = simnorm_dim
    g = L // d
    sel = s_ref[...]                                   # (L, g) block-diagonal 0/1
    selt = st_ref[...]                                 # (g, L)

    # Per-group max (stabilizer).  Broadcast back through selt: the subtracted
    # value only needs to be uniform within each group for softmax invariance.
    # TODO(synk): pltpu.roll XOR-butterfly would avoid this (tm,L)->(tm,g,d)
    # relayout entirely and keep the max in the native lane layout.
    m_g = jnp.max(x.reshape(tm, g, d), axis=-1)                       # (tm, g)
    m = jnp.dot(m_g, selt, preferred_element_type=jnp.float32)        # (tm, L)

    e = jnp.exp(x - m)                                                # lane-dense, EUP
    s_g = jnp.dot(e, sel, preferred_element_type=jnp.float32)         # (tm, g) group sums
    inv = 1.0 / s_g                                                   # exact; only L/d of the data
    inv_lanes = jnp.dot(inv, selt, preferred_element_type=jnp.float32)  # (tm, L)

    # store from the lane-dense (tm, L) view -> unmasked full-lane stores
    o_ref[...] = (e * inv_lanes).astype(o_ref.dtype)


def _simnorm_kernel_reshape(x_ref, o_ref, *, simnorm_dim):
    """Fallback for slabs that are not lane-dense (tiny / ragged shapes)."""
    x = x_ref[...].astype(jnp.float32)                 # (tm, L)
    tm, L = x.shape
    g = L // simnorm_dim
    xg = x.reshape(tm, g, simnorm_dim)
    m = jnp.max(xg, axis=-1, keepdims=True)
    e = jnp.exp(xg - m)
    s = jnp.sum(e, axis=-1, keepdims=True)
    o_ref[...] = (e / s).reshape(tm, L).astype(o_ref.dtype)


def _choose_lanes(total, d, target_lanes):
    """Largest divisor L of `total` with d | L; prefer lane-dense L (multiple
    of 128) and >= 8 rows per slab before growing L wider.  No padding ever
    needed because total % d == 0 guarantees L = d is always valid."""
    best, best_key = d, (-1, -1, -1)
    max_k = max(1, min(target_lanes // d, total // d))
    for k in range(1, max_k + 1):
        L = k * d
        if total % L:
            continue
        rows = total // L
        key = (1 if L % 128 == 0 else 0, min(rows, 8), L)
        if key > best_key:
            best_key, best = key, L
    return best


def simnorm(x, simnorm_dim, *, target_lanes=1024, target_rows=512,
            max_block_bytes=2 * 1024 * 1024):
    """SimNorm: softmax over contiguous groups of `simnorm_dim` in the last dim."""
    shp = x.shape
    d = int(simnorm_dim)
    if shp[-1] % d != 0:
        raise ValueError("last dim must be divisible by simnorm_dim")
    total = math.prod(shp)

    # ---- fold into a lane-dense (n_rows, L) slab; L | total so no padding ----
    L = _choose_lanes(total, d, target_lanes)
    assert L % d == 0 and total % L == 0
    g = L // d
    n_rows = total // L
    x2 = x.reshape(n_rows, L)

    # ---- row tile: multiple of 8, ~<= max_block_bytes, >= 2 grid steps -------
    if n_rows <= 8:
        tm = n_rows                                  # single full-extent block
    else:
        row_cap = max(8, max_block_bytes // (L * 4))
        tm = min(n_rows, target_rows, row_cap)
        tm = max(8, (tm // 8) * 8)
        if _cdiv(n_rows, tm) == 1:
            # v7x has 2 TensorCores: give the "parallel" axis >= 2 steps.
            tm = max(8, _round_up(_cdiv(n_rows, 2), 8))
    grid = (_cdiv(n_rows, tm),)

    itemsize = jnp.dtype(x.dtype).itemsize
    lane_dense = (L % 128 == 0) and (g >= 8)

    compiler_params = pltpu.CompilerParams(
        dimension_semantics=("parallel",),
        vmem_limit_bytes=40 * 1024 * 1024,
    )

    if lane_dense:
        # Constant block-diagonal group selector (L, g) and its transpose.
        gid = jnp.arange(L, dtype=jnp.int32) // d
        sel = (gid[:, None] == jnp.arange(g, dtype=jnp.int32)[None, :]).astype(jnp.float32)
        selt = jnp.transpose(sel)
        cost = pl.CostEstimate(
            flops=int(6 * total * g + 4 * total),
            transcendentals=int(total),
            bytes_accessed=int(2 * total * itemsize + 2 * L * g * 4),
        )
        out = pl.pallas_call(
            functools.partial(_simnorm_kernel_mxu, simnorm_dim=d),
            out_shape=jax.ShapeDtypeStruct((n_rows, L), x.dtype),
            grid_spec=pltpu.PrefetchScalarGridSpec(
                num_scalar_prefetch=0,
                grid=grid,
                in_specs=[
                    pl.BlockSpec((tm, L), lambda i: (i, 0)),
                    pl.BlockSpec((L, g), lambda i: (0, 0)),   # resident, DMA'd once
                    pl.BlockSpec((g, L), lambda i: (0, 0)),   # resident, DMA'd once
                ],
                out_specs=pl.BlockSpec((tm, L), lambda i: (i, 0)),
            ),
            compiler_params=compiler_params,
            cost_estimate=cost,
        )(x2, sel, selt)
    else:
        cost = pl.CostEstimate(
            flops=int(4 * total),
            transcendentals=int(total),
            bytes_accessed=int(2 * total * itemsize),
        )
        out = pl.pallas_call(
            functools.partial(_simnorm_kernel_reshape, simnorm_dim=d),
            out_shape=jax.ShapeDtypeStruct((n_rows, L), x.dtype),
            grid_spec=pltpu.PrefetchScalarGridSpec(
                num_scalar_prefetch=0,
                grid=grid,
                in_specs=[pl.BlockSpec((tm, L), lambda i: (i, 0))],
                out_specs=pl.BlockSpec((tm, L), lambda i: (i, 0)),
            ),
            compiler_params=compiler_params,
            cost_estimate=cost,
        )(x2)

    return out.reshape(shp)


def simnorm_ref(x, simnorm_dim):
    shp = x.shape
    xg = x.reshape(*shp[:-1], -1, simnorm_dim)
    return jax.nn.softmax(xg, axis=-1).reshape(shp)


if __name__ == "__main__":
    key = jax.random.PRNGKey(0)
    k1, k2, k3 = jax.random.split(key, 3)
    simnorm_dim = 8  # cfg.simnorm_dim (TD-MPC2 default)

    # 1) small TD-MPC2-like latent: batch=2, latent=512 -> 64 groups of 8
    x1 = jax.random.normal(k1, (2, 512), dtype=jnp.float32)
    # 2) leading dims; exercises a multi-step grid (2 blocks) on the MXU path
    x2 = jax.random.normal(k2, (4, 8, 512), dtype=jnp.float32)
    # 3) awkward ragged size (total=120): exercises the non-lane-dense fallback
    x3 = jax.random.normal(k3, (5, 24), dtype=jnp.float32)

    for x in (x1, x2, x3):
        y = jax.block_until_ready(simnorm(x, simnorm_dim))
        y_ref = simnorm_ref(x, simnorm_dim)
        assert y.shape == x.shape
        assert bool(jnp.allclose(y, y_ref, atol=5e-3, rtol=5e-3)), "mismatch vs reference"

    print("KERNEL_OK")
</pallas_src>

<mosaic_0001>
module attributes {stable_mosaic.version = 11 : i64} {
  func.func @_simnorm_kernel_mxu(%arg0: i32, %arg1: memref<8x128xf32, #tpu.memory_space<vmem>>, %arg2: memref<128x16xf32, #tpu.memory_space<vmem>>, %arg3: memref<16x128xf32, #tpu.memory_space<vmem>>, %arg4: memref<8x128xf32, #tpu.memory_space<vmem>>) attributes {dimension_semantics = [#tpu.dimension_semantics<parallel>], iteration_bounds = array<i64: 1>, scalar_prefetch = 0 : i64, scratch_operands = 0 : i64, tpu.core_type = #tpu.core_type<tc>, window_params = [{transform_indices = @transform_0, window_bounds = array<i64: 8, 128>}, {pipeline_mode = #tpu.pipeline_mode<synchronous>, transform_indices = @transform_1, window_bounds = array<i64: 128, 16>}, {pipeline_mode = #tpu.pipeline_mode<synchronous>, transform_indices = @transform_2, window_bounds = array<i64: 16, 128>}, {transform_indices = @transform_3, window_bounds = array<i64: 8, 128>}]} {
    %c0 = arith.constant 0 : index
    %c0_0 = arith.constant 0 : index
    %0 = vector.load %arg1[%c0, %c0_0] : memref<8x128xf32, #tpu.memory_space<vmem>>, vector<8x128xf32>
    %c0_1 = arith.constant 0 : index
    %c0_2 = arith.constant 0 : index
    %1 = vector.load %arg2[%c0_1, %c0_2] : memref<128x16xf32, #tpu.memory_space<vmem>>, vector<128x16xf32>
    %c0_3 = arith.constant 0 : index
    %c0_4 = arith.constant 0 : index
    %2 = vector.load %arg3[%c0_3, %c0_4] : memref<16x128xf32, #tpu.memory_space<vmem>>, vector<16x128xf32>
    %3 = vector.shape_cast %0 : vector<8x128xf32> to vector<8x16x8xf32>
    %cst = arith.constant dense<0xFF800000> : vector<8x16xf32>
    %4 = vector.multi_reduction <maximumf>, %3, %cst [2] : vector<8x16x8xf32> to vector<8x16xf32>
    %cst_5 = arith.constant dense<0.000000e+00> : vector<8x128xf32>
    %5 = tpu.matmul %4, %2, %cst_5 {dimension_numbers = #tpu.dot_dimension_numbers<[1], [0], [0], [1], [0, 0, 1, 1], [], []>} : vector<8x16xf32>, vector<16x128xf32>, vector<8x128xf32> -> vector<8x128xf32>
    %6 = arith.subf %0, %5 : vector<8x128xf32>
    %7 = math.exp %6 : vector<8x128xf32>
    %cst_6 = arith.constant dense<0.000000e+00> : vector<8x16xf32>
    %8 = tpu.matmul %7, %1, %cst_6 {dimension_numbers = #tpu.dot_dimension_numbers<[1], [0], [0], [1], [0, 0, 1, 1], [], []>} : vector<8x128xf32>, vector<128x16xf32>, vector<8x16xf32> -> vector<8x16xf32>
    %cst_7 = arith.constant 1.000000e+00 : f32
    %9 = vector.broadcast %cst_7 : f32 to vector<8x16xf32>
    %10 = arith.divf %9, %8 : vector<8x16xf32>
    %cst_8 = arith.constant dense<0.000000e+00> : vector<8x128xf32>
    %11 = tpu.matmul %10, %2, %cst_8 {dimension_numbers = #tpu.dot_dimension_numbers<[1], [0], [0], [1], [0, 0, 1, 1], [], []>} : vector<8x16xf32>, vector<16x128xf32>, vector<8x128xf32> -> vector<8x128xf32>
    %12 = arith.mulf %7, %11 : vector<8x128xf32>
    %c0_9 = arith.constant 0 : index
    %c0_10 = arith.constant 0 : index
    %13 = vector.load %arg4[%c0_9, %c0_10] : memref<8x128xf32, #tpu.memory_space<vmem>>, vector<8x128xf32>
    tpu.vector_store %arg4[%c0_9, %c0_10], %12 {strides = array<i32>} : memref<8x128xf32, #tpu.memory_space<vmem>>, vector<8x128xf32>,
    return
  }
  func.func @transform_0(%arg0: i32) -> (i32, i32) {
    %c0_i32 = arith.constant 0 : i32
    %c0_i32_0 = arith.constant 0 : i32
    return %arg0, %c0_i32 : i32, i32
  }
  func.func @transform_1(%arg0: i32) -> (i32, i32) {
    %c0_i32 = arith.constant 0 : i32
    %c0_i32_0 = arith.constant 0 : i32
    %c0_i32_1 = arith.constant 0 : i32
    return %c0_i32, %c0_i32_0 : i32, i32
  }
  func.func @transform_2(%arg0: i32) -> (i32, i32) {
    %c0_i32 = arith.constant 0 : i32
    %c0_i32_0 = arith.constant 0 : i32
    %c0_i32_1 = arith.constant 0 : i32
    return %c0_i32, %c0_i32_0 : i32, i32
  }
  func.func @transform_3(%arg0: i32) -> (i32, i32) {
    %c0_i32 = arith.constant 0 : i32
    %c0_i32_0 = arith.constant 0 : i32
    return %arg0, %c0_i32 : i32, i32
  }
}

</mosaic_0001>

<llo_original>
// kernel: tpu_custom_call.1
$region0: #{tpu_custom_call.1}
  #allocation0 [shape = 'u32[]', space=smem, size = 0x4, offset = 0x4, fixed_abs, tag = 'smem constant byte address 0x4 - core index']
  #allocation1 [shape = 'u32[72,128]{1,0:T(1,128)}', space=vmem, size = 0x9000, scoped, tag = 'internal scratch']
  %s0 = inlined_call_operand.vmem [shape: f32[8,128], index: 0, kind: input, shape index: {}]
  %s1 = inlined_call_operand.vmem [shape: f32[128,16], index: 1, kind: input, shape index: {}]
  %s2 = inlined_call_operand.vmem [shape: f32[16,128], index: 2, kind: input, shape index: {}]
  %s3 = inlined_call_operand.hbm [shape: f32[8,128], index: 3, kind: output, shape index: {}]
  %s4 = sld [smem:[#allocation0]]
  $region22: #{tpu_custom_call.1} parent=0
    _
  %s6 = ssub.s32 1, %s4
  %s7 = scalar_select 0, %s6, %s4
  $region1: #{tpu_custom_call.1} parent=0
    #allocation2 [shape = 'u8[4096]{0}', space=vmem, size = 0x1000, scoped, tag = 'output window, operand 0, single buffered']
    #allocation3 [shape = 's32[1]{0}', space=sflag, size = 0x4, scoped, tag = 'scoped memory for tpu_custom_call.1']
    %8 = vsyncpa [#allocation3], 0
    // Predicated region
    $region2: #{tpu_custom_call.1} parent=1 // pred_check
      _
    $region3: #{tpu_custom_call.1} parent=1 // pred_check_branch
      %10 = sbr.rel (0) target = $region5
    $region4: #{tpu_custom_call.1} parent=1 // pred_region
      _
    $region5: #{tpu_custom_call.1} parent=1 // pred_fallthru
      _
    // Predicated region
    $region6: #{tpu_custom_call.1} parent=1 // pred_check
      _
    $region7: #{tpu_custom_call.1} parent=1 // pred_check_branch
      %12 = sbr.rel (0) target = $region9
    $region8: #{tpu_custom_call.1} parent=1 // pred_region
      _
    $region9: #{tpu_custom_call.1} parent=1 // pred_fallthru
      _
    // Predicated region
    $region10: #{tpu_custom_call.1} parent=1 // pred_check
      _
    $region11: #{tpu_custom_call.1} parent=1 // pred_check_branch
      %14 = sbr.rel (0) target = $region13
    $region12: #{tpu_custom_call.1} parent=1 // pred_region
      _
    $region13: #{tpu_custom_call.1} parent=1 // pred_fallthru
      _
    %v15 = vld [vmem:[%s0] sm:$0xff]
    %v16 = vld [vmem:[%s1] sm:$0xff]
    %v17 = vld [vmem:[%s1 + $0x8] sm:$0xff]
    %v18 = vld [vmem:[%s1 + $0x10] sm:$0xff]
    %v19 = vld [vmem:[%s1 + $0x18] sm:$0xff]
    %v20 = vld [vmem:[%s1 + $0x20] sm:$0xff]
    %v21 = vld [vmem:[%s1 + $0x28] sm:$0xff]
    %v22 = vld [vmem:[%s1 + $0x30] sm:$0xff]
    %v23 = vld [vmem:[%s1 + $0x38] sm:$0xff]
    %v24 = vld [vmem:[%s1 + $0x40] sm:$0xff]
    %v25 = vld [vmem:[%s1 + $0x48] sm:$0xff]
    %v26 = vld [vmem:[%s1 + $0x50] sm:$0xff]
    %v27 = vld [vmem:[%s1 + $0x58] sm:$0xff]
    %v28 = vld [vmem:[%s1 + $0x60] sm:$0xff]
    %v29 = vld [vmem:[%s1 + $0x68] sm:$0xff]
    %v30 = vld [vmem:[%s1 + $0x70] sm:$0xff]
    %v31 = vld [vmem:[%s1 + $0x78] sm:$0xff]
    %v32 = vld [vmem:[%s2] sm:$0xff]
    %v33 = vld [vmem:[%s2 + $0x8] sm:$0xff]
    %35 = vrot.lane.b32.xlu0 %v15, 120
    %v36 = vpop.permute.xlu0 %35
    %38 = vrot.lane.b32.xlu0 %v15, 112
    %v39 = vpop.permute.xlu0 %38
    %41 = vrot.lane.b32.xlu0 %v15, 104
    %v42 = vpop.permute.xlu0 %41
    %44 = vrot.lane.b32.xlu0 %v15, 96
    %v45 = vpop.permute.xlu0 %44
    %47 = vrot.lane.b32.xlu0 %v15, 88
    %v48 = vpop.permute.xlu0 %47
    %50 = vrot.lane.b32.xlu0 %v15, 80
    %v51 = vpop.permute.xlu0 %50
    %53 = vrot.lane.b32.xlu0 %v15, 72
    %v54 = vpop.permute.xlu0 %53
    %56 = vrot.lane.b32.xlu0 %v15, 64
    %v57 = vpop.permute.xlu0 %56
    %59 = vrot.lane.b32.xlu0 %v15, 56
    %v60 = vpop.permute.xlu0 %59
    %62 = vrot.lane.b32.xlu0 %v15, 48
    %v63 = vpop.permute.xlu0 %62
    %65 = vrot.lane.b32.xlu0 %v15, 40
    %v66 = vpop.permute.xlu0 %65
    %68 = vrot.lane.b32.xlu0 %v15, 32
    %v69 = vpop.permute.xlu0 %68
    %71 = vrot.lane.b32.xlu0 %v15, 24
    %v72 = vpop.permute.xlu0 %71
    %74 = vrot.lane.b32.xlu0 %v15, 16
    %v75 = vpop.permute.xlu0 %74
    %77 = vrot.lane.b32.xlu0 %v15, 8
    %v78 = vpop.permute.xlu0 %77
    %v80 = vrot.slane %v39, 4
    %vm81 = vcmask 1047556
    %v82 = vsel %vm81, %v80, %v15
    %v83 = vrot.slane %v15, 4
    %v84 = vsel %vm81, %v39, %v83
    %v86 = vunpack.c.l.s4 1983009808
    %v87 = vunpack.c.0.s8 %v86
    %v88 = vperm.slane %v82, %v87
    %v90 = vunpack.c.l.s4 1983009808
    %v91 = vunpack.c.0.s8 %v90
    %v92 = vperm.slane %v84, %v91
    %v93 = vrot.slane %v42, 4
    %v94 = vsel %vm81, %v93, %v36
    %v95 = vrot.slane %v36, 4
    %v96 = vsel %vm81, %v42, %v95
    %v98 = vunpack.c.l.s4 1983009808
    %v99 = vunpack.c.0.s8 %v98
    %v100 = vperm.slane %v94, %v99
    %v102 = vunpack.c.l.s4 1983009808
    %v103 = vunpack.c.0.s8 %v102
    %v104 = vperm.slane %v96, %v103
    %v105 = vrot.slane %v51, 4
    %v106 = vsel %vm81, %v105, %v45
    %v107 = vrot.slane %v45, 4
    %v108 = vsel %vm81, %v51, %v107
    %v110 = vunpack.c.l.s4 1983009808
    %v111 = vunpack.c.0.s8 %v110
    %v112 = vperm.slane %v106, %v111
    %v114 = vunpack.c.l.s4 1983009808
    %v115 = vunpack.c.0.s8 %v114
    %v116 = vperm.slane %v108, %v115
    %v117 = vrot.slane %v54, 4
    %v118 = vsel %vm81, %v117, %v48
    %v119 = vrot.slane %v48, 4
    %v120 = vsel %vm81, %v54, %v119
    %v122 = vunpack.c.l.s4 1983009808
    %v123 = vunpack.c.0.s8 %v122
    %v124 = vperm.slane %v118, %v123
    %v126 = vunpack.c.l.s4 1983009808
    %v127 = vunpack.c.0.s8 %v126
    %v128 = vperm.slane %v120, %v127
    %v129 = vrot.slane %v100, 4
    %v130 = vsel %vm81, %v129, %v88
    %v131 = vrot.slane %v88, 4
    %v132 = vsel %vm81, %v100, %v131
    %v134 = vunpack.c.l.s4 1934713408
    %v135 = vunpack.c.0.s8 %v134
    %v136 = vperm.slane %v130, %v135
    %v138 = vunpack.c.l.s4 1934713408
    %v139 = vunpack.c.0.s8 %v138
    %v140 = vperm.slane %v132, %v139
    %v141 = vrot.slane %v104, 4
    %v142 = vsel %vm81, %v141, %v92
    %v143 = vrot.slane %v92, 4
    %v144 = vsel %vm81, %v104, %v143
    %v146 = vunpack.c.l.s4 1934713408
    %v147 = vunpack.c.0.s8 %v146
    %v148 = vperm.slane %v142, %v147
    %v150 = vunpack.c.l.s4 1934713408
    %v151 = vunpack.c.0.s8 %v150
    %v152 = vperm.slane %v144, %v151
    %v153 = vrot.slane %v124, 4
    %v154 = vsel %vm81, %v153, %v112
    %v155 = vrot.slane %v112, 4
    %v156 = vsel %vm81, %v124, %v155
    %v158 = vunpack.c.l.s4 1934713408
    %v159 = vunpack.c.0.s8 %v158
    %v160 = vperm.slane %v154, %v159
    %v162 = vunpack.c.l.s4 1934713408
    %v163 = vunpack.c.0.s8 %v162
    %v164 = vperm.slane %v156, %v163
    %v165 = vrot.slane %v128, 4
    %v166 = vsel %vm81, %v165, %v116
    %v167 = vrot.slane %v116, 4
    %v168 = vsel %vm81, %v128, %v167
    %v170 = vunpack.c.l.s4 1934713408
    %v171 = vunpack.c.0.s8 %v170
    %v172 = vperm.slane %v166, %v171
    %v174 = vunpack.c.l.s4 1934713408
    %v175 = vunpack.c.0.s8 %v174
    %v176 = vperm.slane %v168, %v175
    %v177 = vrot.slane %v160, 4
    %v178 = vsel %vm81, %v177, %v136
    %v179 = vrot.slane %v136, 4
    %v180 = vsel %vm81, %v160, %v179
    %v181 = vrot.slane %v164, 4
    %v182 = vsel %vm81, %v181, %v140
    %v183 = vrot.slane %v140, 4
    %v184 = vsel %vm81, %v164, %v183
    %v185 = vrot.slane %v172, 4
    %v186 = vsel %vm81, %v185, %v148
    %v187 = vrot.slane %v148, 4
    %v188 = vsel %vm81, %v172, %v187
    %v189 = vrot.slane %v176, 4
    %v190 = vsel %vm81, %v189, %v152
    %v191 = vrot.slane %v152, 4
    %v192 = vsel %vm81, %v176, %v191
    %v193 = vrot.slane %v63, 4
    %v194 = vsel %vm81, %v193, %v57
    %v195 = vrot.slane %v57, 4
    %v196 = vsel %vm81, %v63, %v195
    %v198 = vunpack.c.l.s4 1983009808
    %v199 = vunpack.c.0.s8 %v198
    %v200 = vperm.slane %v194, %v199
    %v202 = vunpack.c.l.s4 1983009808
    %v203 = vunpack.c.0.s8 %v202
    %v204 = vperm.slane %v196, %v203
    %v205 = vrot.slane %v66, 4
    %v206 = vsel %vm81, %v205, %v60
    %v207 = vrot.slane %v60, 4
    %v208 = vsel %vm81, %v66, %v207
    %v210 = vunpack.c.l.s4 1983009808
    %v211 = vunpack.c.0.s8 %v210
    %v212 = vperm.slane %v206, %v211
    %v214 = vunpack.c.l.s4 1983009808
    %v215 = vunpack.c.0.s8 %v214
    %v216 = vperm.slane %v208, %v215
    %v217 = vrot.slane %v75, 4
    %v218 = vsel %vm81, %v217, %v69
    %v219 = vrot.slane %v69, 4
    %v220 = vsel %vm81, %v75, %v219
    %v222 = vunpack.c.l.s4 1983009808
    %v223 = vunpack.c.0.s8 %v222
    %v224 = vperm.slane %v218, %v223
    %v226 = vunpack.c.l.s4 1983009808
    %v227 = vunpack.c.0.s8 %v226
    %v228 = vperm.slane %v220, %v227
    %v229 = vrot.slane %v78, 4
    %v230 = vsel %vm81, %v229, %v72
    %v231 = vrot.slane %v72, 4
    %v232 = vsel %vm81, %v78, %v231
    %v234 = vunpack.c.l.s4 1983009808
    %v235 = vunpack.c.0.s8 %v234
    %v236 = vperm.slane %v230, %v235
    %v238 = vunpack.c.l.s4 1983009808
    %v239 = vunpack.c.0.s8 %v238
    %v240 = vperm.slane %v232, %v239
    %v241 = vrot.slane %v212, 4
    %v242 = vsel %vm81, %v241, %v200
    %v243 = vrot.slane %v200, 4
    %v244 = vsel %vm81, %v212, %v243
    %v246 = vunpack.c.l.s4 1934713408
    %v247 = vunpack.c.0.s8 %v246
    %v248 = vperm.slane %v242, %v247
    %v250 = vunpack.c.l.s4 1934713408
    %v251 = vunpack.c.0.s8 %v250
    %v252 = vperm.slane %v244, %v251
    %v253 = vrot.slane %v216, 4
    %v254 = vsel %vm81, %v253, %v204
    %v255 = vrot.slane %v204, 4
    %v256 = vsel %vm81, %v216, %v255
    %v258 = vunpack.c.l.s4 1934713408
    %v259 = vunpack.c.0.s8 %v258
    %v260 = vperm.slane %v254, %v259
    %v262 = vunpack.c.l.s4 1934713408
    %v263 = vunpack.c.0.s8 %v262
    %v264 = vperm.slane %v256, %v263
    %v265 = vrot.slane %v236, 4
    %v266 = vsel %vm81, %v265, %v224
    %v267 = vrot.slane %v224, 4
    %v268 = vsel %vm81, %v236, %v267
    %v270 = vunpack.c.l.s4 1934713408
    %v271 = vunpack.c.0.s8 %v270
    %v272 = vperm.slane %v266, %v271
    %v274 = vunpack.c.l.s4 1934713408
    %v275 = vunpack.c.0.s8 %v274
    %v276 = vperm.slane %v268, %v275
    %v277 = vrot.slane %v240, 4
    %v278 = vsel %vm81, %v277, %v228
    %v279 = vrot.slane %v228, 4
    %v280 = vsel %vm81, %v240, %v279
    %v282 = vunpack.c.l.s4 1934713408
    %v283 = vunpack.c.0.s8 %v282
    %v284 = vperm.slane %v278, %v283
    %v286 = vunpack.c.l.s4 1934713408
    %v287 = vunpack.c.0.s8 %v286
    %v288 = vperm.slane %v280, %v287
    %v289 = vrot.slane %v272, 4
    %v290 = vsel %vm81, %v289, %v248
    %v291 = vrot.slane %v248, 4
    %v292 = vsel %vm81, %v272, %v291
    %v293 = vrot.slane %v276, 4
    %v294 = vsel %vm81, %v293, %v252
    %v295 = vrot.slane %v252, 4
    %v296 = vsel %vm81, %v276, %v295
    %v297 = vrot.slane %v284, 4
    %v298 = vsel %vm81, %v297, %v260
    %v299 = vrot.slane %v260, 4
    %v300 = vsel %vm81, %v284, %v299
    %v301 = vrot.slane %v288, 4
    %v302 = vsel %vm81, %v301, %v264
    %v303 = vrot.slane %v264, 4
    %v304 = vsel %vm81, %v288, %v303
    %vm305 = vcmask 64512
    %v306 = vsel %vm305, %v178, -inf
    %307 = vmax.xlane.f32.xlu0 %v306
    %v308 = vpop.xlane.xlu0 %307
    %v309 = vsel %vm305, %v290, -inf
    %310 = vmax.xlane.f32.xlu0 %v309
    %v311 = vpop.xlane.xlu0 %310
    %v312 = vsel %vm305, %v180, -inf
    %313 = vmax.xlane.f32.xlu0 %v312
    %v314 = vpop.xlane.xlu0 %313
    %v315 = vsel %vm305, %v292, -inf
    %316 = vmax.xlane.f32.xlu0 %v315
    %v317 = vpop.xlane.xlu0 %316
    %v318 = vsel %vm305, %v182, -inf
    %319 = vmax.xlane.f32.xlu0 %v318
    %v320 = vpop.xlane.xlu0 %319
    %v321 = vsel %vm305, %v294, -inf
    %322 = vmax.xlane.f32.xlu0 %v321
    %v323 = vpop.xlane.xlu0 %322
    %v324 = vsel %vm305, %v184, -inf
    %325 = vmax.xlane.f32.xlu0 %v324
    %v326 = vpop.xlane.xlu0 %325
    %v327 = vsel %vm305, %v296, -inf
    %328 = vmax.xlane.f32.xlu0 %v327
    %v329 = vpop.xlane.xlu0 %328
    %v330 = vsel %vm305, %v186, -inf
    %331 = vmax.xlane.f32.xlu0 %v330
    %v332 = vpop.xlane.xlu0 %331
    %v333 = vsel %vm305, %v298, -inf
    %334 = vmax.xlane.f32.xlu0 %v333
    %v335 = vpop.xlane.xlu0 %334
    %v336 = vsel %vm305, %v188, -inf
    %337 = vmax.xlane.f32.xlu0 %v336
    %v338 = vpop.xlane.xlu0 %337
    %v339 = vsel %vm305, %v300, -inf
    %340 = vmax.xlane.f32.xlu0 %v339
    %v341 = vpop.xlane.xlu0 %340
    %v342 = vsel %vm305, %v190, -inf
    %343 = vmax.xlane.f32.xlu0 %v342
    %v344 = vpop.xlane.xlu0 %343
    %v345 = vsel %vm305, %v302, -inf
    %346 = vmax.xlane.f32.xlu0 %v345
    %v347 = vpop.xlane.xlu0 %346
    %v348 = vsel %vm305, %v192, -inf
    %349 = vmax.xlane.f32.xlu0 %v348
    %v350 = vpop.xlane.xlu0 %349
    %v351 = vsel %vm305, %v304, -inf
    %352 = vmax.xlane.f32.xlu0 %v351
    %v353 = vpop.xlane.xlu0 %352
    %v370 = vlaneseq
    %v371 = vand.u32 %v370, 127
    %v372 = vperm.slane %v308, %v371
    %v373 = vadd.s32 %v371, 4294967288
    %v374 = vperm.slane %v311, %v373
    %vm375 = vcmask 130112
    %v376 = vsel %vm375, %v374, %v372
    %v377 = vperm.slane %v314, %v371
    %v378 = vperm.slane %v317, %v373
    %v379 = vsel %vm375, %v378, %v377
    %v380 = vperm.slane %v320, %v371
    %v381 = vperm.slane %v323, %v373
    %v382 = vsel %vm375, %v381, %v380
    %v383 = vperm.slane %v326, %v371
    %v384 = vperm.slane %v329, %v373
    %v385 = vsel %vm375, %v384, %v383
    %v386 = vperm.slane %v332, %v371
    %v387 = vperm.slane %v335, %v373
    %v388 = vsel %vm375, %v387, %v386
    %v389 = vperm.slane %v338, %v371
    %v390 = vperm.slane %v341, %v373
    %v391 = vsel %vm375, %v390, %v389
    %v392 = vperm.slane %v344, %v371
    %v393 = vperm.slane %v347, %v373
    %v394 = vsel %vm375, %v393, %v392
    %v395 = vperm.slane %v350, %v371
    %v396 = vperm.slane %v353, %v373
    %v397 = vsel %vm375, %v396, %v395
    %vm398 = vcmask 1041409
    %v399 = vsel %vm398, %v379, %v376
    %vm400 = vcmask 1042434
    %v401 = vsel %vm400, %v382, %v399
    %vm402 = vcmask 1043459
    %v403 = vsel %vm402, %v385, %v401
    %vm404 = vcmask 1044484
    %v405 = vsel %vm404, %v388, %v403
    %vm406 = vcmask 1045509
    %v407 = vsel %vm406, %v391, %v405
    %vm408 = vcmask 1046534
    %v409 = vsel %vm408, %v394, %v407
    %vm410 = vcmask 1047559
    %v411 = vsel %vm410, %v397, %v409
    %vm412 = vcmask 130048
    %v413 = vsel %vm412, %v411, 0
    %415 = vmatpush.msra.mxu0 0.0
    %416 = vmatpush.msra.mxu0 0.0
    %417 = vmatpush.msra.mxu0 0.0
    %418 = vmatpush.msra.mxu0 0.0
    %419 = vmatpush.msra.mxu0 0.0
    %420 = vmatpush.msra.mxu0 0.0
    %421 = vmatpush.msra.mxu0 0.0
    %422 = vmatpush.msra.mxu0 0.0
    %423 = vmatpush.msra.mxu0 0.0
    %424 = vmatpush.msra.mxu0 0.0
    %425 = vmatpush.msra.mxu0 0.0
    %426 = vmatpush.msra.mxu0 0.0
    %427 = vmatpush.msra.mxu0 0.0
    %428 = vmatpush.msra.mxu0 0.0
    %429 = vmatpush.msra.mxu0 %v33
    %430 = vmatpush.msra.mxu0 %v32
    %431 = vmatmul.f32.gmra.mxu0 %v413
    %v432 = vpop.f32.mrf.mxu0
    %v433 = vadd.f32 0.0, %v432
    %434 = vdwg.mxu0
    %v435 = vsub.f32 %v15, %v433
    %v436 = vmul.f32 %v435, 1.442695
    %v437 = vpow.pop %v436
    %438 = vmatpush.msra.mxu0 %v31
    %439 = vmatpush.msra.mxu0 %v30
    %440 = vmatpush.msra.mxu0 %v29
    %441 = vmatpush.msra.mxu0 %v28
    %442 = vmatpush.msra.mxu0 %v27
    %443 = vmatpush.msra.mxu0 %v26
    %444 = vmatpush.msra.mxu0 %v25
    %445 = vmatpush.msra.mxu0 %v24
    %446 = vmatpush.msra.mxu0 %v23
    %447 = vmatpush.msra.mxu0 %v22
    %448 = vmatpush.msra.mxu0 %v21
    %449 = vmatpush.msra.mxu0 %v20
    %450 = vmatpush.msra.mxu0 %v19
    %451 = vmatpush.msra.mxu0 %v18
    %452 = vmatpush.msra.mxu0 %v17
    %453 = vmatpush.msra.mxu0 %v16
    %454 = vmatmul.f32.gmra.mxu0 %v437
    %v455 = vpop.f32.mrf.mxu0
    %v456 = vadd.f32 0.0, %v455
    %457 = vdwg.mxu0
    %v458 = vrcp.pop %v456
    %v459 = vmul.f32 %v456, %v458
    %v460 = vsub.f32 1.0, %v459
    %v461 = vmul.f32 %v458, %v460
    %v462 = vadd.f32 %v458, %v461
    %vm463 = vweird.f32 %v456
    %vm464 = vweird.f32 %v458
    %vm465 = vmor %vm463, %vm464
    %v466 = vsel %vm465, %v458, %v462
    %v467 = vand.u32 2147483647, %v456
    %vm468 = vcmp.eq.f32.partialorder %v467, 8.507059e+37
    %v469 = vand.u32 %v456, 2147483648
    %v470 = vor.u32 1.1754944e-38, %v469
    %v471 = vsel %vm468, %v470, %v466
    %v472 = vmul.f32 1.0, %v471
    %v474 = vsel %vm412, %v472, 0
    %476 = vmatpush.msra.mxu0 0.0
    %477 = vmatpush.msra.mxu0 0.0
    %478 = vmatpush.msra.mxu0 0.0
    %479 = vmatpush.msra.mxu0 0.0
    %480 = vmatpush.msra.mxu0 0.0
    %481 = vmatpush.msra.mxu0 0.0
    %482 = vmatpush.msra.mxu0 0.0
    %483 = vmatpush.msra.mxu0 0.0
    %484 = vmatpush.msra.mxu0 0.0
    %485 = vmatpush.msra.mxu0 0.0
    %486 = vmatpush.msra.mxu0 0.0
    %487 = vmatpush.msra.mxu0 0.0
    %488 = vmatpush.msra.mxu0 0.0
    %489 = vmatpush.msra.mxu0 0.0
    %490 = vmatpush.msra.mxu0 %v33
    %491 = vmatpush.msra.mxu0 %v32
    %492 = vmatmul.f32.gmra.mxu0 %v474
    %v493 = vpop.f32.mrf.mxu0
    %v494 = vadd.f32 0.0, %v493
    %495 = vdwg.mxu0
    %v496 = vmul.f32 %v437, %v494
    %497 = vst [vmem:[#allocation2] sm:$0xff] %v496
    // Predicated region
    $region14: #{tpu_custom_call.1} parent=1 // pred_check
      _
    $region15: #{tpu_custom_call.1} parent=1 // pred_check_branch
      %499 = sbr.rel (0) target = $region17
    $region16: #{tpu_custom_call.1} parent=1 // pred_region
      %501 = vsyncadd [#allocation3], 0
      %s503 = sshll.u32 [#allocation2], 4
      %s504 = int_to_ptr.vmem [resolvable:$true] %s503
      %s505 = sshll.u32 %s3, 4
      %s506 = int_to_ptr.hbm [resolvable:$true] %s505
      %508 = dma.vmem_to_hbm [thread:$0]  %s504, 128, %s506, [#allocation3]
    $region17: #{tpu_custom_call.1} parent=1 // pred_fallthru
      _
    // Predicated region
    $region18: #{tpu_custom_call.1} parent=1 // pred_check
      _
    $region19: #{tpu_custom_call.1} parent=1 // pred_check_branch
      %510 = sbr.rel (0) target = $region21
    $region20: #{tpu_custom_call.1} parent=1 // pred_region
      %512 = dma.done [#allocation3], 128
    $region21: #{tpu_custom_call.1} parent=1 // pred_fallthru
      _
    %513 = vsyncpa [#allocation3], 1

</llo_original>
